<compile_context>
chip_gen: v5e
topology: v5e:2x2
jax: 0.10.0
libtpu: 0.0.40
codegen_flags: <defaults>
</compile_context>

<pallas_src>
import functools

import jax
import jax.numpy as jnp
from jax.experimental import pallas as pl
from jax.experimental.pallas import tpu as pltpu

_LANE = 128
_SUBLANE = 8


def _round_up(n, m):
    return ((n + m - 1) // m) * m


def _vmem_capacity_bytes():
    """Per-TensorCore VMEM capacity; conservative (v7x, 64 MiB) fallback."""
    try:
        return int(pltpu.get_tpu_info().vmem_capacity_bytes)
    except Exception:
        return 64 * 1024 * 1024


# ---------------------------------------------------------------------------
# Kernels
# ---------------------------------------------------------------------------
def _resadd_resident_kernel(x_ref, w_ref, b_ref, o_ref):
    """fn(x) + x with the full (Hp, Hp) bf16 weight resident in VMEM."""
    x = x_ref[...]                                          # (tm, Hp), x dtype
    x_f32 = x.astype(jnp.float32)
    fn_x = jnp.dot(x.astype(jnp.bfloat16), w_ref[...],      # bf16 MXU, f32 acc
                   preferred_element_type=jnp.float32)
    fn_x = fn_x + b_ref[...]                                 # bias (VPU)
    o_ref[...] = (fn_x + x_f32).astype(o_ref.dtype)          # residual add


def _resadd_coltiled_kernel(x_ref, w_ref, b_ref, o_ref, *, tn):
    """fn(x) + x with W blocked over output columns (W not fully resident)."""
    j = pl.program_id(0)                                     # column-tile index
    x = x_ref[...]                                           # (tm, Hp)
    fn_x = jnp.dot(x.astype(jnp.bfloat16), w_ref[...],       # (tm, tn)
                   preferred_element_type=jnp.float32)
    fn_x = fn_x + b_ref[...]
    off = pl.multiple_of(j * tn, _LANE)
    res = x_ref[:, pl.ds(off, tn)].astype(jnp.float32)       # residual slice
    o_ref[...] = (fn_x + res).astype(o_ref.dtype)


# ---------------------------------------------------------------------------
# One-time parameter preparation (hoisted out of the per-call hot path)
# ---------------------------------------------------------------------------
def prepare_linear_params(w, b):
    """Pad Linear(H, H) params to lane-dense Hp and cast W to bf16 once."""
    h_in, h_out = w.shape
    assert h_in == h_out, "ResidualAdd requires fn to preserve the hidden dim"
    hp = _round_up(h_in, _LANE)
    w_p = jnp.pad(w, ((0, hp - h_in), (0, hp - h_out))).astype(jnp.bfloat16)
    b_p = jnp.pad(b.reshape(1, h_out).astype(jnp.float32),
                  ((0, 0), (0, hp - h_out)))
    return w_p, b_p, h_in


# ---------------------------------------------------------------------------
# Wrapper
# ---------------------------------------------------------------------------
def residual_add(x, w_p, b_p, h, *, tm=None, tn=None, force_column_tiled=False):
    """out = (x @ W + b) + x.  x: (T, H) f32 or bf16; w_p/b_p/h from
    prepare_linear_params (pre-padded, W already bf16)."""
    t_rows, h_in = x.shape
    if h_in != h:
        raise ValueError(f"x hidden dim {h_in} != prepared param dim {h}")
    hp = w_p.shape[0]
    x_isz = jnp.dtype(x.dtype).itemsize

    cap = _vmem_capacity_bytes()
    budget = (cap * 3) // 4                      # ~48 MiB v7x, ~96 MiB v5e/v6e
    headroom_limit = cap - 8 * 1024 * 1024

    w_resident_bytes = hp * hp * 2               # Buffered(1): single copy
    bias_bytes = hp * 4

    def resident_need(m):
        # 2x double-buffered x in + 2x double-buffered out + resident W + bias
        return 4 * m * hp * x_isz + w_resident_bytes + bias_bytes

    t_cap = max(_SUBLANE, _round_up(t_rows, _SUBLANE))
    use_resident = (not force_column_tiled
                    and resident_need(min(256, t_cap)) <= budget)

    if use_resident:
        # ---------------- resident-weight path (grid over row tiles) --------
        if tm is None:
            tm = 512
            while tm > _SUBLANE and resident_need(tm) > budget:
                tm //= 2                          # dispatch guarantees tm>=256
        tm = min(tm, t_cap)
        tp = _round_up(max(t_rows, tm), tm)
        needs_pad = (tp != t_rows) or (hp != h_in)
        x_p = jnp.pad(x, ((0, tp - t_rows), (0, hp - h_in))) if needs_pad else x

        vmem_need = resident_need(tm)
        vmem_limit = int(min(max(vmem_need + vmem_need // 4, 32 * 1024 * 1024),
                             headroom_limit))

        out_p = pl.pallas_call(
            _resadd_resident_kernel,
            out_shape=jax.ShapeDtypeStruct((tp, hp), x.dtype),
            grid_spec=pl.GridSpec(
                grid=(tp // tm,),
                in_specs=[
                    pl.BlockSpec((tm, hp), lambda i: (i, 0)),       # stream x
                    pl.BlockSpec((hp, hp), lambda i: (0, 0),        # resident W
                                 pipeline_mode=pl.Buffered(buffer_count=1)),
                    pl.BlockSpec((1, hp), lambda i: (0, 0),         # resident b
                                 pipeline_mode=pl.Buffered(buffer_count=1)),
                ],
                out_specs=pl.BlockSpec((tm, hp), lambda i: (i, 0)),
            ),
            compiler_params=pltpu.CompilerParams(
                dimension_semantics=("parallel",),   # rows split across TCs
                vmem_limit_bytes=vmem_limit,
            ),
        )(x_p, w_p, b_p)
        return out_p[:t_rows, :h_in] if needs_pad else out_p

    # ---------------- column-tiled path (W blocked over N) ------------------
    if tn is None:
        tn = _LANE
        for cand in (512, 384, 256, 128):
            if cand <= hp and hp % cand == 0:
                tn = cand
                break
    assert tn % _LANE == 0 and hp % tn == 0, "tn must be a 128-multiple dividing Hp"

    def col_need(m):
        # double-buffered x stripe + out tile + W column block + bias block
        return (2 * m * hp * x_isz + 2 * m * tn * x_isz
                + 2 * hp * tn * 2 + 2 * tn * 4)

    if tm is None:
        tm = 512
        while tm > _SUBLANE and col_need(tm) > budget:
            tm //= 2
    tm = min(tm, t_cap)
    tp = _round_up(max(t_rows, tm), tm)
    needs_pad = (tp != t_rows) or (hp != h_in)
    x_p = jnp.pad(x, ((0, tp - t_rows), (0, hp - h_in))) if needs_pad else x

    vmem_need = col_need(tm)
    vmem_limit = int(min(max(vmem_need + vmem_need // 4, 32 * 1024 * 1024),
                         headroom_limit))

    kernel = functools.partial(_resadd_coltiled_kernel, tn=tn)
    out_p = pl.pallas_call(
        kernel,
        out_shape=jax.ShapeDtypeStruct((tp, hp), x.dtype),
        grid_spec=pl.GridSpec(
            # column axis outermost: each W block is loaded once and reused
            # across all row tiles of x.
            grid=(hp // tn, tp // tm),
            in_specs=[
                pl.BlockSpec((tm, hp), lambda j, i: (i, 0)),   # full-K x stripe
                pl.BlockSpec((hp, tn), lambda j, i: (0, j)),   # W column block
                pl.BlockSpec((1, tn), lambda j, i: (0, j)),    # bias block
            ],
            out_specs=pl.BlockSpec((tm, tn), lambda j, i: (i, j)),
        ),
        compiler_params=pltpu.CompilerParams(
            dimension_semantics=("arbitrary", "parallel"),
            vmem_limit_bytes=vmem_limit,
        ),
    )(x_p, w_p, b_p)
    return out_p[:t_rows, :h_in] if needs_pad else out_p


# ---------------------------------------------------------------------------
# Demo / correctness check
# ---------------------------------------------------------------------------
if __name__ == "__main__":
    batch, seq, hidden = 2, 8, 32

    key = jax.random.PRNGKey(0)
    kx, kw, kb = jax.random.split(key, 3)

    x = jax.random.normal(kx, (batch, seq, hidden), dtype=jnp.float32)
    w = jax.random.normal(kw, (hidden, hidden), dtype=jnp.float32) * 0.02
    b = jax.random.normal(kb, (hidden,), dtype=jnp.float32) * 0.02

    x2d = x.reshape(batch * seq, hidden)

    # One-time parameter prep (pad + bf16 cast hoisted out of the hot path).
    w_p, b_p, h = prepare_linear_params(w, b)

    # Main path: resident-weight kernel, auto tile sizing.
    out2d = residual_add(x2d, w_p, b_p, h)
    out = out2d.reshape(batch, seq, hidden)
    jax.block_until_ready(out)

    ref = (x2d @ w + b) + x2d
    assert jnp.allclose(out2d, ref, atol=2e-2, rtol=2e-2), "resident path mismatch"

    # Also exercise the column-tiled (W-not-resident) fallback at a small size.
    tokens2, hidden2 = 64, 256
    k2x, k2w, k2b = jax.random.split(jax.random.PRNGKey(1), 3)
    x2 = jax.random.normal(k2x, (tokens2, hidden2), dtype=jnp.float32)
    w2 = jax.random.normal(k2w, (hidden2, hidden2), dtype=jnp.float32) * 0.02
    b2 = jax.random.normal(k2b, (hidden2,), dtype=jnp.float32) * 0.02
    w2_p, b2_p, h2 = prepare_linear_params(w2, b2)
    out2 = residual_add(x2, w2_p, b2_p, h2, force_column_tiled=True, tn=128)
    jax.block_until_ready(out2)
    ref2 = (x2 @ w2 + b2) + x2
    assert jnp.allclose(out2, ref2, atol=2e-2, rtol=2e-2), "column-tiled path mismatch"

    print("KERNEL_OK")
</pallas_src>

<mosaic_0001>
module attributes {stable_mosaic.version = 11 : i64} {
  func.func @_resadd_resident_kernel(%arg0: i32, %arg1: memref<16x128xf32, #tpu.memory_space<vmem>>, %arg2: memref<128x128xbf16, #tpu.memory_space<vmem>>, %arg3: memref<1x128xf32, #tpu.memory_space<vmem>>, %arg4: memref<16x128xf32, #tpu.memory_space<vmem>>) attributes {dimension_semantics = [#tpu.dimension_semantics<parallel>], iteration_bounds = array<i64: 1>, scalar_prefetch = 0 : i64, scratch_operands = 0 : i64, tpu.core_type = #tpu.core_type<tc>, window_params = [{transform_indices = @transform_0, window_bounds = array<i64: 16, 128>}, {pipeline_mode = #tpu.pipeline_mode<synchronous>, transform_indices = @transform_1, window_bounds = array<i64: 128, 128>}, {pipeline_mode = #tpu.pipeline_mode<synchronous>, transform_indices = @transform_2, window_bounds = array<i64: 1, 128>}, {transform_indices = @transform_3, window_bounds = array<i64: 16, 128>}]} {
    %c0 = arith.constant 0 : index
    %c0_0 = arith.constant 0 : index
    %0 = vector.load %arg1[%c0, %c0_0] : memref<16x128xf32, #tpu.memory_space<vmem>>, vector<16x128xf32>
    %1 = arith.truncf %0 : vector<16x128xf32> to vector<16x128xbf16>
    %c0_1 = arith.constant 0 : index
    %c0_2 = arith.constant 0 : index
    %2 = vector.load %arg2[%c0_1, %c0_2] : memref<128x128xbf16, #tpu.memory_space<vmem>>, vector<128x128xbf16>
    %cst = arith.constant dense<0.000000e+00> : vector<16x128xf32>
    %3 = tpu.matmul %1, %2, %cst {dimension_numbers = #tpu.dot_dimension_numbers<[1], [0], [0], [1], [0, 0, 1, 1], [], []>} : vector<16x128xbf16>, vector<128x128xbf16>, vector<16x128xf32> -> vector<16x128xf32>
    %c0_3 = arith.constant 0 : index
    %c0_4 = arith.constant 0 : index
    %4 = vector.load %arg3[%c0_3, %c0_4] : memref<1x128xf32, #tpu.memory_space<vmem>>, vector<1x128xf32>
    %5 = vector.broadcast %4 : vector<1x128xf32> to vector<16x128xf32>
    %6 = arith.addf %3, %5 : vector<16x128xf32>
    %7 = arith.addf %6, %0 : vector<16x128xf32>
    %c0_5 = arith.constant 0 : index
    %c0_6 = arith.constant 0 : index
    %8 = vector.load %arg4[%c0_5, %c0_6] : memref<16x128xf32, #tpu.memory_space<vmem>>, vector<16x128xf32>
    tpu.vector_store %arg4[%c0_5, %c0_6], %7 {strides = array<i32>} : memref<16x128xf32, #tpu.memory_space<vmem>>, vector<16x128xf32>,
    return
  }
  func.func @transform_0(%arg0: i32) -> (i32, i32) {
    %c0_i32 = arith.constant 0 : i32
    %c0_i32_0 = arith.constant 0 : i32
    return %arg0, %c0_i32 : i32, i32
  }
  func.func @transform_1(%arg0: i32) -> (i32, i32) {
    %c0_i32 = arith.constant 0 : i32
    %c0_i32_0 = arith.constant 0 : i32
    %c0_i32_1 = arith.constant 0 : i32
    return %c0_i32, %c0_i32_0 : i32, i32
  }
  func.func @transform_2(%arg0: i32) -> (i32, i32) {
    %c0_i32 = arith.constant 0 : i32
    %c0_i32_0 = arith.constant 0 : i32
    %c0_i32_1 = arith.constant 0 : i32
    return %c0_i32, %c0_i32_0 : i32, i32
  }
  func.func @transform_3(%arg0: i32) -> (i32, i32) {
    %c0_i32 = arith.constant 0 : i32
    %c0_i32_0 = arith.constant 0 : i32
    return %arg0, %c0_i32 : i32, i32
  }
}

</mosaic_0001>

<llo_original>
// kernel: tpu_custom_call.1
$region0: #{tpu_custom_call.1}
  #allocation0 [shape = 'u32[]', space=smem, size = 0x4, offset = 0x4, fixed_abs, tag = 'smem constant byte address 0x4 - core index']
  #allocation1 [shape = 'u32[72,128]{1,0:T(1,128)}', space=vmem, size = 0x9000, scoped, tag = 'internal scratch']
  %s0 = inlined_call_operand.hbm [shape: f32[16,128], index: 0, kind: input, shape index: {}]
  %s1 = inlined_call_operand.hbm [shape: bf16[128,128], index: 1, kind: input, shape index: {}]
  %s2 = inlined_call_operand.vmem [shape: f32[1,128], index: 2, kind: input, shape index: {}]
  %s3 = inlined_call_operand.hbm [shape: f32[16,128], index: 3, kind: output, shape index: {}]
  %s4 = sld [smem:[#allocation0]]
  $region30: #{tpu_custom_call.1} parent=0
    _
  %s6 = ssub.s32 1, %s4
  %s7 = scalar_select 0, %s6, %s4
  $region1: #{tpu_custom_call.1} parent=0
    #allocation2 [shape = 'u8[8192]{0}', space=vmem, size = 0x2000, scoped, tag = 'input window, operand 0, single buffered']
    #allocation3 [shape = 's32[1]{0}', space=sflag, size = 0x4, scoped, tag = 'scoped memory for tpu_custom_call.1']
    #allocation4 [shape = 's32[1]{0}', space=sflag, size = 0x4, scoped, tag = 'scoped memory for tpu_custom_call.1']
    #allocation5 [shape = 'u8[32768]{0}', space=vmem, size = 0x8000, scoped, tag = 'input window, operand 1, single buffered']
    #allocation6 [shape = 's32[1]{0}', space=sflag, size = 0x4, scoped, tag = 'scoped memory for tpu_custom_call.1']
    #allocation7 [shape = 'u8[8192]{0}', space=vmem, size = 0x2000, scoped, tag = 'output window, operand 0, single buffered']
    %8 = vsyncpa [#allocation3], 0
    %9 = vsyncpa [#allocation6], 0
    %10 = vsyncpa [#allocation4], 0
    // Predicated region
    $region2: #{tpu_custom_call.1} parent=1 // pred_check
      _
    $region3: #{tpu_custom_call.1} parent=1 // pred_check_branch
      %12 = sbr.rel (0) target = $region5
    $region4: #{tpu_custom_call.1} parent=1 // pred_region
      %14 = vsyncadd [#allocation3], 0
      %s15 = sshll.u32 %s0, 4
      %s16 = int_to_ptr.hbm [resolvable:$true] %s15
      %s17 = sshll.u32 [#allocation2], 4
      %s18 = int_to_ptr.vmem [resolvable:$true] %s17
      %23 = dma.hbm_to_vmem [thread:$0]  %s16, 256, %s18, [#allocation3], 128, 128, 8
    $region5: #{tpu_custom_call.1} parent=1 // pred_fallthru
      _
    // Predicated region
    $region6: #{tpu_custom_call.1} parent=1 // pred_check
      _
    $region7: #{tpu_custom_call.1} parent=1 // pred_check_branch
      %25 = sbr.rel (0) target = $region9
    $region8: #{tpu_custom_call.1} parent=1 // pred_region
      %27 = vsyncadd [#allocation6], 0
      %s28 = sshll.u32 %s1, 4
      %s29 = int_to_ptr.hbm [resolvable:$true] %s28
      %s30 = sshll.u32 [#allocation5], 4
      %s31 = int_to_ptr.vmem [resolvable:$true] %s30
      %36 = dma.hbm_to_vmem [thread:$0]  %s29, 1024, %s31, [#allocation6], 64, 64, 4
    $region9: #{tpu_custom_call.1} parent=1 // pred_fallthru
      _
    // Predicated region
    $region10: #{tpu_custom_call.1} parent=1 // pred_check
      _
    $region11: #{tpu_custom_call.1} parent=1 // pred_check_branch
      %38 = sbr.rel (0) target = $region13
    $region12: #{tpu_custom_call.1} parent=1 // pred_region
      _
    $region13: #{tpu_custom_call.1} parent=1 // pred_fallthru
      _
    // Predicated region
    $region14: #{tpu_custom_call.1} parent=1 // pred_check
      _
    $region15: #{tpu_custom_call.1} parent=1 // pred_check_branch
      %40 = sbr.rel (0) target = $region17
    $region16: #{tpu_custom_call.1} parent=1 // pred_region
      %42 = dma.done [#allocation3], 256
    $region17: #{tpu_custom_call.1} parent=1 // pred_fallthru
      _
    // Predicated region
    $region18: #{tpu_custom_call.1} parent=1 // pred_check
      _
    $region19: #{tpu_custom_call.1} parent=1 // pred_check_branch
      %44 = sbr.rel (0) target = $region21
    $region20: #{tpu_custom_call.1} parent=1 // pred_region
      %46 = dma.done [#allocation6], 1024
    $region21: #{tpu_custom_call.1} parent=1 // pred_fallthru
      _
    %v47 = vld [vmem:[#allocation2] sm:$0xff]
    %v48 = vld [vmem:[#allocation2 + $0x8] sm:$0xff]
    %v49 = vpack.c.bf16 %v48, %v47
    %v50 = vld [vmem:[#allocation5] sm:$0xf]
    %v51 = vld [vmem:[#allocation5 + $0x4] sm:$0xf]
    %v52 = vld [vmem:[#allocation5 + $0x8] sm:$0xf]
    %v53 = vld [vmem:[#allocation5 + $0xc] sm:$0xf]
    %v54 = vld [vmem:[#allocation5 + $0x10] sm:$0xf]
    %v55 = vld [vmem:[#allocation5 + $0x14] sm:$0xf]
    %v56 = vld [vmem:[#allocation5 + $0x18] sm:$0xf]
    %v57 = vld [vmem:[#allocation5 + $0x1c] sm:$0xf]
    %v58 = vld [vmem:[#allocation5 + $0x20] sm:$0xf]
    %v59 = vld [vmem:[#allocation5 + $0x24] sm:$0xf]
    %v60 = vld [vmem:[#allocation5 + $0x28] sm:$0xf]
    %v61 = vld [vmem:[#allocation5 + $0x2c] sm:$0xf]
    %v62 = vld [vmem:[#allocation5 + $0x30] sm:$0xf]
    %v63 = vld [vmem:[#allocation5 + $0x34] sm:$0xf]
    %v64 = vld [vmem:[#allocation5 + $0x38] sm:$0xf]
    %v65 = vld [vmem:[#allocation5 + $0x3c] sm:$0xf]
    %v66 = vld [vmem:[%s2] sm:$0x1]
    %v68 = vperm.slane %v66, 0
    %v86 = vunpack.c.l.b16 %v50
    %v87 = vunpack.c.l.b16 %v51
    %v88 = vunpack.c.l.b16 %v52
    %v89 = vunpack.c.l.b16 %v53
    %v90 = vunpack.c.l.b16 %v54
    %v91 = vunpack.c.l.b16 %v55
    %v92 = vunpack.c.l.b16 %v56
    %v93 = vunpack.c.l.b16 %v57
    %v94 = vunpack.c.l.b16 %v58
    %v95 = vunpack.c.l.b16 %v59
    %v96 = vunpack.c.l.b16 %v60
    %v97 = vunpack.c.l.b16 %v61
    %v98 = vunpack.c.l.b16 %v62
    %v99 = vunpack.c.l.b16 %v63
    %v100 = vunpack.c.l.b16 %v64
    %v101 = vunpack.c.l.b16 %v65
    %v102 = vpack.c.b16 %v87, %v86
    %v103 = vpack.c.b16 %v89, %v88
    %v104 = vpack.c.b16 %v91, %v90
    %v105 = vpack.c.b16 %v93, %v92
    %v106 = vpack.c.b16 %v95, %v94
    %v107 = vpack.c.b16 %v97, %v96
    %v108 = vpack.c.b16 %v99, %v98
    %v109 = vpack.c.b16 %v101, %v100
    %118 = vmatpush.bf16.msra.mxu0 %v109
    %119 = vmatpush.bf16.msra.mxu0 %v108
    %120 = vmatpush.bf16.msra.mxu0 %v107
    %121 = vmatpush.bf16.msra.mxu0 %v106
    %122 = vmatpush.bf16.msra.mxu0 %v105
    %123 = vmatpush.bf16.msra.mxu0 %v104
    %124 = vmatpush.bf16.msra.mxu0 %v103
    %125 = vmatpush.bf16.msra.mxu0 %v102
    %126 = vmatmul.bf16.gmra.mxu0 %v49
    %v127 = vpop.f32.mrf.mxu0
    %v128 = vadd.f32 %v68, %v127
    %v129 = vpop.f32.mrf.mxu0
    %v130 = vadd.f32 %v68, %v129
    %131 = vdwg.mxu0
    %v132 = vadd.f32 %v128, %v47
    %v133 = vadd.f32 %v130, %v48
    %134 = vst [vmem:[#allocation7] sm:$0xff] %v132
    %135 = vst [vmem:[#allocation7 + $0x8] sm:$0xff] %v133
    // Predicated region
    $region22: #{tpu_custom_call.1} parent=1 // pred_check
      _
    $region23: #{tpu_custom_call.1} parent=1 // pred_check_branch
      %137 = sbr.rel (0) target = $region25
    $region24: #{tpu_custom_call.1} parent=1 // pred_region
      %139 = vsyncadd [#allocation4], 0
      %s140 = sshll.u32 [#allocation7], 4
      %s141 = int_to_ptr.vmem [resolvable:$true] %s140
      %s142 = sshll.u32 %s3, 4
      %s143 = int_to_ptr.hbm [resolvable:$true] %s142
      %148 = dma.vmem_to_hbm [thread:$0]  %s141, 256, %s143, [#allocation4], 128, 128, 8
    $region25: #{tpu_custom_call.1} parent=1 // pred_fallthru
      _
    // Predicated region
    $region26: #{tpu_custom_call.1} parent=1 // pred_check
      _
    $region27: #{tpu_custom_call.1} parent=1 // pred_check_branch
      %150 = sbr.rel (0) target = $region29
    $region28: #{tpu_custom_call.1} parent=1 // pred_region
      %152 = dma.done [#allocation4], 256
    $region29: #{tpu_custom_call.1} parent=1 // pred_fallthru
      _
    %153 = vsyncpa [#allocation3], 1
    %154 = vsyncpa [#allocation6], 1
    %155 = vsyncpa [#allocation4], 1

</llo_original>
